<compile_context>
chip_gen: v5e
topology: v5e:2x2
jax: 0.10.0
libtpu: 0.0.40
codegen_flags: <defaults>
</compile_context>

<pallas_src>
import jax
import jax.numpy as jnp
from jax.experimental import pallas as pl
from jax.experimental.pallas import tpu as pltpu

STATE_DIM = 8      # env.observation_space.shape[0] for LunarLander-v2
ACTION_DIM = 4     # env.action_space.n for LunarLander-v2
HIDDEN = 128
OUT_PAD = 128      # pad logits to a full lane-width so the output store is lane-dense
DROP_P = 0.6
MAX_TB = 512       # batch-tile cap (vreg-pressure bound; sweep {256,512,1024} for huge B)


def _round_up(n, m):
    return ((n + m - 1) // m) * m


def _policy_kernel(x_ref, w1_ref, w2_ref, mask_ref, out_ref):
    # ---- layer 1: x @ W1 (MXU, f32 accumulate) ----
    h = jnp.dot(x_ref[...], w1_ref[...],
                preferred_element_type=jnp.float32)          # (TB, HIDDEN)

    # ---- Dropout (mask is 0 or 1/(1-p); all-ones in eval mode) then ReLU ----
    h = jnp.maximum(h * mask_ref[...], 0.0)

    # ---- layer 2: h @ W2_padded (MXU) -> lane-dense (TB, 128) logits ----
    # Columns >= ACTION_DIM come from zero-padded W2 columns (logit == 0 there).
    logits = jnp.dot(h, w2_ref[...],
                     preferred_element_type=jnp.float32)     # (TB, OUT_PAD)

    # ---- Softmax over the ACTION_DIM valid lanes ----
    # Including the padded zero-logits in the max only shifts the exponent (softmax is
    # shift-invariant); padded lanes are excluded from the sum via the lane mask.
    lane = jax.lax.broadcasted_iota(jnp.int32, logits.shape, 1)
    m = jnp.max(logits, axis=-1, keepdims=True)
    e = jnp.where(lane < ACTION_DIM, jnp.exp(logits - m), 0.0)
    out_ref[...] = e / jnp.sum(e, axis=-1, keepdims=True)


def policy_forward(x, w1, w2, *, key=None, training=True):
    """Forward of the LunarLander Policy module.

    x  : (B, STATE_DIM)  float32
    w1 : (STATE_DIM, HIDDEN)  float32   -- l1.weight transposed (bias=False)
    w2 : (HIDDEN, ACTION_DIM) float32   -- l2.weight transposed (bias=False)
    """
    B = x.shape[0]
    x = x.astype(jnp.float32)

    # Batch tiling: a single grid step for typical RL batch sizes; tile at MAX_TB otherwise.
    tb = min(MAX_TB, _round_up(B, 8))
    b_pad = _round_up(B, tb)
    if b_pad != B:
        x = jnp.pad(x, ((0, b_pad - B), (0, 0)))

    # Dropout mask with nn.Dropout(p) training semantics: keep w.p. (1-p), scale by 1/(1-p).
    # TODO(synk): bit-exact parity with torch's RNG stream is not reproducible; semantics match.
    if training:
        if key is None:
            raise ValueError("training=True requires a PRNG key for the dropout mask")
        keep = jax.random.bernoulli(key, 1.0 - DROP_P, (b_pad, HIDDEN))
        mask = keep.astype(jnp.float32) * (1.0 / (1.0 - DROP_P))
    else:
        mask = jnp.ones((b_pad, HIDDEN), jnp.float32)

    # Zero-pad W2 columns to a full 128-lane output (lane-dense store in the kernel).
    w2p = jnp.zeros((HIDDEN, OUT_PAD), jnp.float32).at[:, :ACTION_DIM].set(
        w2.astype(jnp.float32))

    out = pl.pallas_call(
        _policy_kernel,
        out_shape=jax.ShapeDtypeStruct((b_pad, OUT_PAD), jnp.float32),
        grid=(b_pad // tb,),
        in_specs=[
            pl.BlockSpec((tb, STATE_DIM), lambda i: (i, 0)),       # x tile
            pl.BlockSpec((STATE_DIM, HIDDEN), lambda i: (0, 0)),   # W1 (grid-invariant)
            pl.BlockSpec((HIDDEN, OUT_PAD), lambda i: (0, 0)),     # W2 padded (grid-invariant)
            pl.BlockSpec((tb, HIDDEN), lambda i: (i, 0)),          # dropout mask tile
        ],
        out_specs=pl.BlockSpec((tb, OUT_PAD), lambda i: (i, 0)),
        compiler_params=pltpu.CompilerParams(
            dimension_semantics=("parallel",)),                    # independent batch tiles
    )(x, w1.astype(jnp.float32), w2p, mask)

    return out[:B, :ACTION_DIM]


def _init_linear(key, fan_in, fan_out):
    # Mimic nn.Linear default init (uniform in [-1/sqrt(fan_in), 1/sqrt(fan_in)]),
    # stored pre-transposed as (fan_in, fan_out).
    bound = 1.0 / jnp.sqrt(jnp.float32(fan_in))
    return jax.random.uniform(key, (fan_in, fan_out), jnp.float32, -bound, bound)


if __name__ == "__main__":
    key = jax.random.PRNGKey(0)
    kx, k1, k2, kd = jax.random.split(key, 4)

    B = 8
    x = jax.random.normal(kx, (B, STATE_DIM), jnp.float32)
    w1 = _init_linear(k1, STATE_DIM, HIDDEN)
    w2 = _init_linear(k2, HIDDEN, ACTION_DIM)

    # Eval-mode (dropout = identity): deterministic, compare against a pure-JAX reference.
    probs_eval = policy_forward(x, w1, w2, training=False)
    ref = jax.nn.softmax(jnp.maximum(x @ w1, 0.0) @ w2, axis=-1)
    jax.block_until_ready(probs_eval)
    assert probs_eval.shape == (B, ACTION_DIM)
    assert bool(jnp.allclose(probs_eval, ref, atol=1e-5, rtol=1e-5))

    # Training-mode (stochastic dropout, the PyTorch module's default mode).
    probs_train = policy_forward(x, w1, w2, key=kd, training=True)
    jax.block_until_ready(probs_train)
    assert probs_train.shape == (B, ACTION_DIM)
    assert bool(jnp.all(jnp.isfinite(probs_train)))
    assert bool(jnp.allclose(jnp.sum(probs_train, axis=-1), 1.0, atol=1e-5))

    print("KERNEL_OK")
</pallas_src>

<mosaic_0001>
module attributes {stable_mosaic.version = 11 : i64} {
  func.func @_policy_kernel(%arg0: i32, %arg1: memref<8x8xf32, #tpu.memory_space<vmem>>, %arg2: memref<8x128xf32, #tpu.memory_space<vmem>>, %arg3: memref<128x128xf32, #tpu.memory_space<vmem>>, %arg4: memref<8x128xf32, #tpu.memory_space<vmem>>, %arg5: memref<8x128xf32, #tpu.memory_space<vmem>>) attributes {dimension_semantics = [#tpu.dimension_semantics<parallel>], iteration_bounds = array<i64: 1>, scalar_prefetch = 0 : i64, scratch_operands = 0 : i64, tpu.core_type = #tpu.core_type<tc>, window_params = [{transform_indices = @transform_0, window_bounds = array<i64: 8, 8>}, {pipeline_mode = #tpu.pipeline_mode<synchronous>, transform_indices = @transform_1, window_bounds = array<i64: 8, 128>}, {pipeline_mode = #tpu.pipeline_mode<synchronous>, transform_indices = @transform_2, window_bounds = array<i64: 128, 128>}, {transform_indices = @transform_3, window_bounds = array<i64: 8, 128>}, {transform_indices = @transform_4, window_bounds = array<i64: 8, 128>}]} {
    %c0 = arith.constant 0 : index
    %c0_0 = arith.constant 0 : index
    %0 = vector.load %arg1[%c0, %c0_0] : memref<8x8xf32, #tpu.memory_space<vmem>>, vector<8x8xf32>
    %c0_1 = arith.constant 0 : index
    %c0_2 = arith.constant 0 : index
    %1 = vector.load %arg2[%c0_1, %c0_2] : memref<8x128xf32, #tpu.memory_space<vmem>>, vector<8x128xf32>
    %cst = arith.constant dense<0.000000e+00> : vector<8x128xf32>
    %2 = tpu.matmul %0, %1, %cst {dimension_numbers = #tpu.dot_dimension_numbers<[1], [0], [0], [1], [0, 0, 1, 1], [], []>} : vector<8x8xf32>, vector<8x128xf32>, vector<8x128xf32> -> vector<8x128xf32>
    %c0_3 = arith.constant 0 : index
    %c0_4 = arith.constant 0 : index
    %3 = vector.load %arg4[%c0_3, %c0_4] : memref<8x128xf32, #tpu.memory_space<vmem>>, vector<8x128xf32>
    %4 = arith.mulf %2, %3 : vector<8x128xf32>
    %cst_5 = arith.constant 0.000000e+00 : f32
    %5 = vector.broadcast %cst_5 : f32 to vector<8x128xf32>
    %6 = arith.maximumf %4, %5 : vector<8x128xf32>
    %c0_6 = arith.constant 0 : index
    %c0_7 = arith.constant 0 : index
    %7 = vector.load %arg3[%c0_6, %c0_7] : memref<128x128xf32, #tpu.memory_space<vmem>>, vector<128x128xf32>
    %cst_8 = arith.constant dense<0.000000e+00> : vector<8x128xf32>
    %8 = tpu.matmul %6, %7, %cst_8 {dimension_numbers = #tpu.dot_dimension_numbers<[1], [0], [0], [1], [0, 0, 1, 1], [], []>} : vector<8x128xf32>, vector<128x128xf32>, vector<8x128xf32> -> vector<8x128xf32>
    %9 = tpu.iota {dimensions = array<i32: 1>} : vector<8x128xi32>
    %cst_9 = arith.constant dense<0xFF800000> : vector<8xf32>
    %10 = vector.multi_reduction <maximumf>, %8, %cst_9 [1] : vector<8x128xf32> to vector<8xf32>
    %11 = vector.shape_cast %10 : vector<8xf32> to vector<8x1xf32>
    %c4_i32 = arith.constant 4 : i32
    %12 = vector.broadcast %c4_i32 : i32 to vector<8x128xi32>
    %13 = arith.cmpi slt, %9, %12 : vector<8x128xi32>
    %14 = vector.broadcast %11 : vector<8x1xf32> to vector<8x128xf32>
    %15 = arith.subf %8, %14 : vector<8x128xf32>
    %16 = math.exp %15 : vector<8x128xf32>
    %cst_10 = arith.constant 0.000000e+00 : f32
    %17 = vector.broadcast %cst_10 : f32 to vector<8x128xf32>
    %18 = arith.select %13, %16, %17 : vector<8x128xi1>, vector<8x128xf32>
    %cst_11 = arith.constant dense<0.000000e+00> : vector<8xf32>
    %19 = vector.multi_reduction <add>, %18, %cst_11 [1] : vector<8x128xf32> to vector<8xf32>
    %20 = vector.shape_cast %19 : vector<8xf32> to vector<8x1xf32>
    %21 = vector.broadcast %20 : vector<8x1xf32> to vector<8x128xf32>
    %22 = arith.divf %18, %21 : vector<8x128xf32>
    %c0_12 = arith.constant 0 : index
    %c0_13 = arith.constant 0 : index
    %23 = vector.load %arg5[%c0_12, %c0_13] : memref<8x128xf32, #tpu.memory_space<vmem>>, vector<8x128xf32>
    tpu.vector_store %arg5[%c0_12, %c0_13], %22 {strides = array<i32>} : memref<8x128xf32, #tpu.memory_space<vmem>>, vector<8x128xf32>,
    return
  }
  func.func @transform_0(%arg0: i32) -> (i32, i32) {
    %c0_i32 = arith.constant 0 : i32
    %c0_i32_0 = arith.constant 0 : i32
    return %arg0, %c0_i32 : i32, i32
  }
  func.func @transform_1(%arg0: i32) -> (i32, i32) {
    %c0_i32 = arith.constant 0 : i32
    %c0_i32_0 = arith.constant 0 : i32
    %c0_i32_1 = arith.constant 0 : i32
    return %c0_i32, %c0_i32_0 : i32, i32
  }
  func.func @transform_2(%arg0: i32) -> (i32, i32) {
    %c0_i32 = arith.constant 0 : i32
    %c0_i32_0 = arith.constant 0 : i32
    %c0_i32_1 = arith.constant 0 : i32
    return %c0_i32, %c0_i32_0 : i32, i32
  }
  func.func @transform_3(%arg0: i32) -> (i32, i32) {
    %c0_i32 = arith.constant 0 : i32
    %c0_i32_0 = arith.constant 0 : i32
    return %arg0, %c0_i32 : i32, i32
  }
  func.func @transform_4(%arg0: i32) -> (i32, i32) {
    %c0_i32 = arith.constant 0 : i32
    %c0_i32_0 = arith.constant 0 : i32
    return %arg0, %c0_i32 : i32, i32
  }
}

</mosaic_0001>

<llo_original>
// kernel: tpu_custom_call.1
$region0: #{tpu_custom_call.1}
  #allocation0 [shape = 'u32[]', space=smem, size = 0x4, offset = 0x4, fixed_abs, tag = 'smem constant byte address 0x4 - core index']
  #allocation1 [shape = 'u32[72,128]{1,0:T(1,128)}', space=vmem, size = 0x9000, scoped, tag = 'internal scratch']
  %s0 = inlined_call_operand.hbm [shape: f32[8,8], index: 0, kind: input, shape index: {}]
  %s1 = inlined_call_operand.hbm [shape: f32[8,128], index: 1, kind: input, shape index: {}]
  %s2 = inlined_call_operand.hbm [shape: f32[128,128], index: 2, kind: input, shape index: {}]
  %s3 = inlined_call_operand.hbm [shape: f32[8,128], index: 3, kind: input, shape index: {}]
  %s4 = inlined_call_operand.hbm [shape: f32[8,128], index: 4, kind: output, shape index: {}]
  %s5 = sld [smem:[#allocation0]]
  $region42: #{tpu_custom_call.1} parent=0
    _
  %s7 = ssub.s32 1, %s5
  %s8 = scalar_select 0, %s7, %s5
  $region1: #{tpu_custom_call.1} parent=0
    #allocation2 [shape = 'u8[4096]{0}', space=vmem, size = 0x1000, scoped, tag = 'input window, operand 0, single buffered']
    #allocation3 [shape = 's32[1]{0}', space=sflag, size = 0x4, scoped, tag = 'scoped memory for tpu_custom_call.1']
    #allocation4 [shape = 's32[1]{0}', space=sflag, size = 0x4, scoped, tag = 'scoped memory for tpu_custom_call.1']
    #allocation5 [shape = 'u8[4096]{0}', space=vmem, size = 0x1000, scoped, tag = 'input window, operand 1, single buffered']
    #allocation6 [shape = 's32[1]{0}', space=sflag, size = 0x4, scoped, tag = 'scoped memory for tpu_custom_call.1']
    #allocation7 [shape = 'u8[65536]{0}', space=vmem, size = 0x10000, scoped, tag = 'input window, operand 2, single buffered']
    #allocation8 [shape = 'u8[4096]{0}', space=vmem, size = 0x1000, scoped, tag = 'input window, operand 3, single buffered']
    #allocation9 [shape = 's32[1]{0}', space=sflag, size = 0x4, scoped, tag = 'scoped memory for tpu_custom_call.1']
    #allocation10 [shape = 'u8[4096]{0}', space=vmem, size = 0x1000, scoped, tag = 'output window, operand 0, single buffered']
    %9 = vsyncpa [#allocation3], 0
    %10 = vsyncpa [#allocation6], 0
    %11 = vsyncpa [#allocation9], 0
    %12 = vsyncpa [#allocation4], 0
    // Predicated region
    $region2: #{tpu_custom_call.1} parent=1 // pred_check
      _
    $region3: #{tpu_custom_call.1} parent=1 // pred_check_branch
      %14 = sbr.rel (0) target = $region5
    $region4: #{tpu_custom_call.1} parent=1 // pred_region
      %16 = vsyncadd [#allocation3], 0
      %s18 = sshll.u32 %s0, 4
      %s19 = int_to_ptr.hbm [resolvable:$true] %s18
      %s20 = sshll.u32 [#allocation2], 4
      %s21 = int_to_ptr.vmem [resolvable:$true] %s20
      %23 = dma.hbm_to_vmem [thread:$0]  %s19, 128, %s21, [#allocation3]
    $region5: #{tpu_custom_call.1} parent=1 // pred_fallthru
      _
    // Predicated region
    $region6: #{tpu_custom_call.1} parent=1 // pred_check
      _
    $region7: #{tpu_custom_call.1} parent=1 // pred_check_branch
      %25 = sbr.rel (0) target = $region9
    $region8: #{tpu_custom_call.1} parent=1 // pred_region
      %27 = vsyncadd [#allocation6], 0
      %s29 = sshll.u32 %s1, 4
      %s30 = int_to_ptr.hbm [resolvable:$true] %s29
      %s31 = sshll.u32 [#allocation5], 4
      %s32 = int_to_ptr.vmem [resolvable:$true] %s31
      %34 = dma.hbm_to_vmem [thread:$0]  %s30, 128, %s32, [#allocation6]
    $region9: #{tpu_custom_call.1} parent=1 // pred_fallthru
      _
    // Predicated region
    $region10: #{tpu_custom_call.1} parent=1 // pred_check
      _
    $region11: #{tpu_custom_call.1} parent=1 // pred_check_branch
      %36 = sbr.rel (0) target = $region13
    $region12: #{tpu_custom_call.1} parent=1 // pred_region
      %38 = vsyncadd [#allocation6], 0
      %s39 = sshll.u32 %s2, 4
      %s40 = int_to_ptr.hbm [resolvable:$true] %s39
      %s41 = sshll.u32 [#allocation7], 4
      %s42 = int_to_ptr.vmem [resolvable:$true] %s41
      %47 = dma.hbm_to_vmem [thread:$0]  %s40, 2048, %s42, [#allocation6], 128, 128, 8
    $region13: #{tpu_custom_call.1} parent=1 // pred_fallthru
      _
    // Predicated region
    $region14: #{tpu_custom_call.1} parent=1 // pred_check
      _
    $region15: #{tpu_custom_call.1} parent=1 // pred_check_branch
      %49 = sbr.rel (0) target = $region17
    $region16: #{tpu_custom_call.1} parent=1 // pred_region
      %51 = vsyncadd [#allocation9], 0
      %s53 = sshll.u32 %s3, 4
      %s54 = int_to_ptr.hbm [resolvable:$true] %s53
      %s55 = sshll.u32 [#allocation8], 4
      %s56 = int_to_ptr.vmem [resolvable:$true] %s55
      %58 = dma.hbm_to_vmem [thread:$0]  %s54, 128, %s56, [#allocation9]
    $region17: #{tpu_custom_call.1} parent=1 // pred_fallthru
      _
    // Predicated region
    $region18: #{tpu_custom_call.1} parent=1 // pred_check
      _
    $region19: #{tpu_custom_call.1} parent=1 // pred_check_branch
      %60 = sbr.rel (0) target = $region21
    $region20: #{tpu_custom_call.1} parent=1 // pred_region
      %62 = dma.done [#allocation3], 128
    $region21: #{tpu_custom_call.1} parent=1 // pred_fallthru
      _
    // Predicated region
    $region22: #{tpu_custom_call.1} parent=1 // pred_check
      _
    $region23: #{tpu_custom_call.1} parent=1 // pred_check_branch
      %64 = sbr.rel (0) target = $region25
    $region24: #{tpu_custom_call.1} parent=1 // pred_region
      %66 = dma.done [#allocation6], 128
    $region25: #{tpu_custom_call.1} parent=1 // pred_fallthru
      _
    // Predicated region
    $region26: #{tpu_custom_call.1} parent=1 // pred_check
      _
    $region27: #{tpu_custom_call.1} parent=1 // pred_check_branch
      %68 = sbr.rel (0) target = $region29
    $region28: #{tpu_custom_call.1} parent=1 // pred_region
      %70 = dma.done [#allocation6], 2048
    $region29: #{tpu_custom_call.1} parent=1 // pred_fallthru
      _
    // Predicated region
    $region30: #{tpu_custom_call.1} parent=1 // pred_check
      _
    $region31: #{tpu_custom_call.1} parent=1 // pred_check_branch
      %72 = sbr.rel (0) target = $region33
    $region32: #{tpu_custom_call.1} parent=1 // pred_region
      %74 = dma.done [#allocation9], 128
    $region33: #{tpu_custom_call.1} parent=1 // pred_fallthru
      _
    %v75 = vld [vmem:[#allocation2] sm:$0xff]
    %v76 = vld [vmem:[#allocation5] sm:$0xff]
    %vm77 = vcmask 64512
    %v79 = vsel %vm77, %v75, 0
    %81 = vmatpush.msra.mxu0 0.0
    %82 = vmatpush.msra.mxu0 0.0
    %83 = vmatpush.msra.mxu0 0.0
    %84 = vmatpush.msra.mxu0 0.0
    %85 = vmatpush.msra.mxu0 0.0
    %86 = vmatpush.msra.mxu0 0.0
    %87 = vmatpush.msra.mxu0 0.0
    %88 = vmatpush.msra.mxu0 0.0
    %89 = vmatpush.msra.mxu0 0.0
    %90 = vmatpush.msra.mxu0 0.0
    %91 = vmatpush.msra.mxu0 0.0
    %92 = vmatpush.msra.mxu0 0.0
    %93 = vmatpush.msra.mxu0 0.0
    %94 = vmatpush.msra.mxu0 0.0
    %95 = vmatpush.msra.mxu0 0.0
    %96 = vmatpush.msra.mxu0 %v76
    %97 = vmatmul.f32.gmra.mxu0 %v79
    %v98 = vpop.f32.mrf.mxu0
    %v99 = vadd.f32 0.0, %v98
    %100 = vdwg.mxu0
    %v101 = vld [vmem:[#allocation8] sm:$0xff]
    %v102 = vmul.f32 %v99, %v101
    %v103 = vmax.f32 %v102, 0.0
    %v104 = vld [vmem:[#allocation7] sm:$0xff]
    %v105 = vld [vmem:[#allocation7 + $0x8] sm:$0xff]
    %v106 = vld [vmem:[#allocation7 + $0x10] sm:$0xff]
    %v107 = vld [vmem:[#allocation7 + $0x18] sm:$0xff]
    %v108 = vld [vmem:[#allocation7 + $0x20] sm:$0xff]
    %v109 = vld [vmem:[#allocation7 + $0x28] sm:$0xff]
    %v110 = vld [vmem:[#allocation7 + $0x30] sm:$0xff]
    %v111 = vld [vmem:[#allocation7 + $0x38] sm:$0xff]
    %v112 = vld [vmem:[#allocation7 + $0x40] sm:$0xff]
    %v113 = vld [vmem:[#allocation7 + $0x48] sm:$0xff]
    %v114 = vld [vmem:[#allocation7 + $0x50] sm:$0xff]
    %v115 = vld [vmem:[#allocation7 + $0x58] sm:$0xff]
    %v116 = vld [vmem:[#allocation7 + $0x60] sm:$0xff]
    %v117 = vld [vmem:[#allocation7 + $0x68] sm:$0xff]
    %v118 = vld [vmem:[#allocation7 + $0x70] sm:$0xff]
    %v119 = vld [vmem:[#allocation7 + $0x78] sm:$0xff]
    %120 = vmatpush.msra.mxu0 %v119
    %121 = vmatpush.msra.mxu0 %v118
    %122 = vmatpush.msra.mxu0 %v117
    %123 = vmatpush.msra.mxu0 %v116
    %124 = vmatpush.msra.mxu0 %v115
    %125 = vmatpush.msra.mxu0 %v114
    %126 = vmatpush.msra.mxu0 %v113
    %127 = vmatpush.msra.mxu0 %v112
    %128 = vmatpush.msra.mxu0 %v111
    %129 = vmatpush.msra.mxu0 %v110
    %130 = vmatpush.msra.mxu0 %v109
    %131 = vmatpush.msra.mxu0 %v108
    %132 = vmatpush.msra.mxu0 %v107
    %133 = vmatpush.msra.mxu0 %v106
    %134 = vmatpush.msra.mxu0 %v105
    %135 = vmatpush.msra.mxu0 %v104
    %136 = vmatmul.f32.gmra.mxu0 %v103
    %v137 = vpop.f32.mrf.mxu0
    %v138 = vadd.f32 0.0, %v137
    %139 = vdwg.mxu0
    %v140 = vlaneseq
    %v141 = vand.u32 %v140, 127
    %142 = vmax.xlane.f32.xlu0 %v138
    %v143 = vpop.xlane.xlu0 %142
    %vm144 = vcmp.lt.s32.totalorder %v141, 4
    %v145 = vsub.f32 %v138, %v143
    %v146 = vmul.f32 %v145, 1.442695
    %v147 = vpow.pop %v146
    %v148 = vsel %vm144, %v147, 0.0
    %149 = vadd.xlane.f32.xlu0 %v148
    %v150 = vpop.xlane.xlu0 %149
    %v151 = vrcp.pop %v150
    %v152 = vmul.f32 %v150, %v151
    %v153 = vsub.f32 1.0, %v152
    %v154 = vmul.f32 %v151, %v153
    %v155 = vadd.f32 %v151, %v154
    %vm156 = vweird.f32 %v150
    %vm157 = vweird.f32 %v151
    %vm158 = vmor %vm156, %vm157
    %v159 = vsel %vm158, %v151, %v155
    %v160 = vand.u32 2147483647, %v150
    %vm161 = vcmp.eq.f32.partialorder %v160, 8.507059e+37
    %v162 = vand.u32 %v150, 2147483648
    %v163 = vor.u32 1.1754944e-38, %v162
    %v164 = vsel %vm161, %v163, %v159
    %v165 = vmul.f32 %v148, %v164
    %166 = vst [vmem:[#allocation10] sm:$0xff] %v165
    // Predicated region
    $region34: #{tpu_custom_call.1} parent=1 // pred_check
      _
    $region35: #{tpu_custom_call.1} parent=1 // pred_check_branch
      %168 = sbr.rel (0) target = $region37
    $region36: #{tpu_custom_call.1} parent=1 // pred_region
      %170 = vsyncadd [#allocation4], 0
      %s172 = sshll.u32 [#allocation10], 4
      %s173 = int_to_ptr.vmem [resolvable:$true] %s172
      %s174 = sshll.u32 %s4, 4
      %s175 = int_to_ptr.hbm [resolvable:$true] %s174
      %177 = dma.vmem_to_hbm [thread:$0]  %s173, 128, %s175, [#allocation4]
    $region37: #{tpu_custom_call.1} parent=1 // pred_fallthru
      _
    // Predicated region
    $region38: #{tpu_custom_call.1} parent=1 // pred_check
      _
    $region39: #{tpu_custom_call.1} parent=1 // pred_check_branch
      %179 = sbr.rel (0) target = $region41
    $region40: #{tpu_custom_call.1} parent=1 // pred_region
      %181 = dma.done [#allocation4], 128
    $region41: #{tpu_custom_call.1} parent=1 // pred_fallthru
      _
    %182 = vsyncpa [#allocation3], 1
    %183 = vsyncpa [#allocation6], 1
    %184 = vsyncpa [#allocation9], 1
    %185 = vsyncpa [#allocation4], 1

</llo_original>
